<compile_context>
chip_gen: v6e
topology: v6e:2x2x1
jax: 0.10.0
libtpu: 0.0.40
codegen_flags: <defaults>
</compile_context>

<pallas_src>
import jax
import jax.numpy as jnp
from jax.experimental import pallas as pl
from jax.experimental.pallas import tpu as pltpu


# Safe on every generation: well under v7x's 64 MiB/TC physical VMEM, and the
# tile working sets below are only a few MiB anyway.
_VMEM_LIMIT_BYTES = 48 * 1024 * 1024


def _hidden_kernel(x_ref, w1_ref, b1_ref, h_ref):
    """hidden = tanh(x @ W1 + b1) for one batch tile (bf16 output)."""
    h = jnp.dot(x_ref[...], w1_ref[...], preferred_element_type=jnp.float32)
    h_ref[...] = jnp.tanh(h + b1_ref[...]).astype(h_ref.dtype)


def _logits_kernel(h_ref, w2_ref, b2_ref, o_ref):
    """logits = hidden @ W2 + b2 for one (batch tile, vocab tile)."""
    out = jnp.dot(h_ref[...], w2_ref[...], preferred_element_type=jnp.float32)
    o_ref[...] = (out + b2_ref[...]).astype(o_ref.dtype)


def neural_lm1_forward(x, w1, b1, w2, b2, *, block_b=512, block_v=2048,
                       logits_dtype=jnp.bfloat16):
    """NeuralLM1 forward.

    x:  [B, D] float32
    w1: [D, H], b1: [1, H]     (first Linear, weight stored as [in, out])
    w2: [H, V], b2: [1, V]     (second Linear, weight stored as [in, out])
    Returns [B, V] logits in `logits_dtype` (bf16 by default; pass
    jnp.float32 if the downstream consumer needs full-width logits).
    """
    B, D = x.shape
    H = w1.shape[1]
    V = w2.shape[1]

    tb = min(block_b, B)
    tv = min(block_v, V)
    assert B % tb == 0, "batch must be divisible by the batch tile"
    assert V % tv == 0, "vocab must be divisible by the vocab tile"

    # bf16 matmul inputs (MXU native, halves streamed-weight HBM bytes);
    # biases / accumulation / tanh stay f32.
    x_lp = x.astype(jnp.bfloat16)
    w1_lp = w1.astype(jnp.bfloat16)
    w2_lp = w2.astype(jnp.bfloat16)

    n_b = B // tb
    n_v = V // tv

    # ---- Layer 1: hidden = tanh(x @ W1 + b1), batch-tiled, bf16 output ----
    hidden = pl.pallas_call(
        _hidden_kernel,
        out_shape=jax.ShapeDtypeStruct((B, H), jnp.bfloat16),
        grid_spec=pltpu.PrefetchScalarGridSpec(
            num_scalar_prefetch=0,
            grid=(n_b,),
            in_specs=[
                pl.BlockSpec((tb, D), lambda i: (i, 0)),   # x batch tile
                pl.BlockSpec((D, H), lambda i: (0, 0)),    # W1 (resident)
                pl.BlockSpec((1, H), lambda i: (0, 0)),    # b1 (resident)
            ],
            out_specs=pl.BlockSpec((tb, H), lambda i: (i, 0)),
        ),
        compiler_params=pltpu.CompilerParams(
            dimension_semantics=("parallel",),
            vmem_limit_bytes=_VMEM_LIMIT_BYTES,
        ),
        cost_estimate=pl.CostEstimate(
            flops=2 * B * D * H,
            transcendentals=B * H,
            bytes_accessed=2 * (B * D + D * H + B * H) + 4 * H,
        ),
    )(x_lp, w1_lp, b1)

    # ---- Layer 2 (LM head): logits = hidden @ W2 + b2 ----
    # Grid order (vocab outer, batch inner): W2's block index (0, j) is
    # constant across the inner batch axis, so each W2 tile is streamed from
    # HBM exactly once.  No scratch carry -> both axes are "parallel"
    # (megacore-shardable on v7x; no-op on v5e/v6e).
    out_bytes = jnp.dtype(logits_dtype).itemsize
    logits = pl.pallas_call(
        _logits_kernel,
        out_shape=jax.ShapeDtypeStruct((B, V), logits_dtype),
        grid_spec=pltpu.PrefetchScalarGridSpec(
            num_scalar_prefetch=0,
            grid=(n_v, n_b),
            in_specs=[
                pl.BlockSpec((tb, H), lambda j, i: (i, 0)),   # hidden batch tile
                pl.BlockSpec((H, tv), lambda j, i: (0, j)),   # W2 vocab tile (read once)
                pl.BlockSpec((1, tv), lambda j, i: (0, j)),   # b2 vocab tile
            ],
            out_specs=pl.BlockSpec((tb, tv), lambda j, i: (i, j)),
        ),
        compiler_params=pltpu.CompilerParams(
            dimension_semantics=("parallel", "parallel"),
            vmem_limit_bytes=_VMEM_LIMIT_BYTES,
        ),
        cost_estimate=pl.CostEstimate(
            flops=2 * B * H * V,
            transcendentals=0,
            bytes_accessed=(2 * H * V                 # W2, streamed once
                            + n_v * 2 * B * H         # hidden, once per vocab tile
                            + 4 * V                   # b2
                            + out_bytes * B * V),     # logits writeback
        ),
    )(hidden, w2_lp, b2)

    # TODO(synk): fusing the downstream consumer (log-softmax / cross-entropy)
    # into the LM-head kernel would remove the B*V logit writeback entirely.
    return logits


def init_linear(key, in_dim, out_dim):
    """Deterministic PyTorch-style Linear init (uniform +/- 1/sqrt(in_dim)).

    Returns weight in [in, out] layout and bias as [1, out]."""
    kw, kb = jax.random.split(key)
    bound = 1.0 / jnp.sqrt(in_dim)
    w = jax.random.uniform(kw, (in_dim, out_dim), jnp.float32, -bound, bound)
    b = jax.random.uniform(kb, (1, out_dim), jnp.float32, -bound, bound)
    return w, b


if __name__ == "__main__":
    # Small shapes consistent with the module: x is [batch, input_dim].
    # Tile sizes chosen so both grids are actually exercised:
    #   layer 1 grid = (2,), layer 2 grid = (2, 2).
    B, INPUT_DIM, HIDDEN_DIM, VOCAB = 256, 64, 128, 512

    key = jax.random.PRNGKey(0)
    kx, k1, k2 = jax.random.split(key, 3)

    x = jax.random.normal(kx, (B, INPUT_DIM), jnp.float32)
    w1, b1 = init_linear(k1, INPUT_DIM, HIDDEN_DIM)   # architecture[0]
    w2, b2 = init_linear(k2, HIDDEN_DIM, VOCAB)       # architecture[2]

    out = neural_lm1_forward(x, w1, b1, w2, b2, block_b=128, block_v=256)
    out = jax.block_until_ready(out)

    # Reference in plain JAX mirroring the kernel's numerics (bf16 matmul
    # inputs, f32 accumulate, f32 bias/tanh, bf16 hidden + bf16 logits).
    xb = x.astype(jnp.bfloat16).astype(jnp.float32)
    w1b = w1.astype(jnp.bfloat16).astype(jnp.float32)
    w2b = w2.astype(jnp.bfloat16).astype(jnp.float32)
    h = jnp.tanh(xb @ w1b + b1)
    hb = h.astype(jnp.bfloat16).astype(jnp.float32)
    ref = (hb @ w2b + b2).astype(jnp.bfloat16).astype(jnp.float32)

    out_f32 = out.astype(jnp.float32)
    assert out.shape == (B, VOCAB)
    assert jnp.allclose(out_f32, ref, atol=2e-2, rtol=2e-2), (
        float(jnp.max(jnp.abs(out_f32 - ref))))

    print("KERNEL_OK")
</pallas_src>

<mosaic_0001>
module attributes {stable_mosaic.version = 11 : i64} {
  func.func @_hidden_kernel(%arg0: i32, %arg1: memref<128x64xbf16, #tpu.memory_space<vmem>>, %arg2: memref<64x128xbf16, #tpu.memory_space<vmem>>, %arg3: memref<1x128xf32, #tpu.memory_space<vmem>>, %arg4: memref<128x128xbf16, #tpu.memory_space<vmem>>) attributes {dimension_semantics = [#tpu.dimension_semantics<parallel>], iteration_bounds = array<i64: 2>, scalar_prefetch = 0 : i64, scratch_operands = 0 : i64, tpu.core_type = #tpu.core_type<tc>, window_params = [{transform_indices = @transform_0, window_bounds = array<i64: 128, 64>}, {pipeline_mode = #tpu.pipeline_mode<synchronous>, transform_indices = @transform_1, window_bounds = array<i64: 64, 128>}, {pipeline_mode = #tpu.pipeline_mode<synchronous>, transform_indices = @transform_2, window_bounds = array<i64: 1, 128>}, {transform_indices = @transform_3, window_bounds = array<i64: 128, 128>}]} {
    %c0 = arith.constant 0 : index
    %c0_0 = arith.constant 0 : index
    %0 = vector.load %arg1[%c0, %c0_0] : memref<128x64xbf16, #tpu.memory_space<vmem>>, vector<128x64xbf16>
    %c0_1 = arith.constant 0 : index
    %c0_2 = arith.constant 0 : index
    %1 = vector.load %arg2[%c0_1, %c0_2] : memref<64x128xbf16, #tpu.memory_space<vmem>>, vector<64x128xbf16>
    %cst = arith.constant dense<0.000000e+00> : vector<128x128xf32>
    %2 = tpu.matmul %0, %1, %cst {dimension_numbers = #tpu.dot_dimension_numbers<[1], [0], [0], [1], [0, 0, 1, 1], [], []>} : vector<128x64xbf16>, vector<64x128xbf16>, vector<128x128xf32> -> vector<128x128xf32>
    %c0_3 = arith.constant 0 : index
    %c0_4 = arith.constant 0 : index
    %3 = vector.load %arg3[%c0_3, %c0_4] : memref<1x128xf32, #tpu.memory_space<vmem>>, vector<1x128xf32>
    %4 = vector.broadcast %3 : vector<1x128xf32> to vector<128x128xf32>
    %5 = arith.addf %2, %4 : vector<128x128xf32>
    %6 = math.tanh %5 : vector<128x128xf32>
    %7 = arith.truncf %6 : vector<128x128xf32> to vector<128x128xbf16>
    %c0_5 = arith.constant 0 : index
    %c0_6 = arith.constant 0 : index
    %8 = vector.load %arg4[%c0_5, %c0_6] : memref<128x128xbf16, #tpu.memory_space<vmem>>, vector<128x128xbf16>
    tpu.vector_store %arg4[%c0_5, %c0_6], %7 {strides = array<i32>} : memref<128x128xbf16, #tpu.memory_space<vmem>>, vector<128x128xbf16>,
    return
  }
  func.func @transform_0(%arg0: i32) -> (i32, i32) {
    %c0_i32 = arith.constant 0 : i32
    %c0_i32_0 = arith.constant 0 : i32
    return %arg0, %c0_i32 : i32, i32
  }
  func.func @transform_1(%arg0: i32) -> (i32, i32) {
    %c0_i32 = arith.constant 0 : i32
    %c0_i32_0 = arith.constant 0 : i32
    %c0_i32_1 = arith.constant 0 : i32
    return %c0_i32, %c0_i32_0 : i32, i32
  }
  func.func @transform_2(%arg0: i32) -> (i32, i32) {
    %c0_i32 = arith.constant 0 : i32
    %c0_i32_0 = arith.constant 0 : i32
    %c0_i32_1 = arith.constant 0 : i32
    return %c0_i32, %c0_i32_0 : i32, i32
  }
  func.func @transform_3(%arg0: i32) -> (i32, i32) {
    %c0_i32 = arith.constant 0 : i32
    %c0_i32_0 = arith.constant 0 : i32
    return %arg0, %c0_i32 : i32, i32
  }
}

</mosaic_0001>

<llo_original>
// kernel: tpu_custom_call.1
$region0: #{tpu_custom_call.1}
  #allocation0 [shape = 'u32[]', space=smem, size = 0x4, offset = 0x4, fixed_abs, tag = 'smem constant byte address 0x4 - core index']
  #allocation1 [shape = 'u32[144,128]{1,0:T(1,128)}', space=vmem, size = 0x12000, scoped, tag = 'internal scratch']
  %s0 = inlined_call_operand.vmem [shape: bf16[256,64], index: 0, kind: input, shape index: {}]
  %s1 = inlined_call_operand.vmem [shape: bf16[64,128], index: 1, kind: input, shape index: {}]
  %s2 = inlined_call_operand.vmem [shape: f32[1,128], index: 2, kind: input, shape index: {}]
  %s3 = inlined_call_operand.hbm [shape: bf16[256,128], index: 3, kind: output, shape index: {}]
  %s4 = sld [smem:[#allocation0]]
  $region45: #{tpu_custom_call.1} parent=0
    _
  %s6 = ssub.s32 1, %s4
  %s7 = scalar_select 0, %s6, %s4
  $region1: #{tpu_custom_call.1} parent=0
    #allocation2 [shape = 'u8[65536]{0}', space=vmem, size = 0x10000, scoped, tag = 'output window, operand 0']
    #allocation3 [shape = 's32[2]{0}', space=sflag, size = 0x8, scoped, tag = 'scoped memory for tpu_custom_call.1']
    %8 = vsyncpa [#allocation3], 0
    %s9 = scalar_lea.sflag [#allocation3], 1
    %10 = vsyncpa %s9, 0
    loop: start=0, step=1, limit=4
    $region2: #{tpu_custom_call.1} parent=1 // loop_pre_header
      _
    $region3: #{tpu_custom_call.1} parent=1 // loop_header
      %s12 = sphi 0, %s16
      %p13 = scmp.ge.s32.totalorder %s12, 4
      %s22 = sphi 0, %s24
      %s25 = sphi 0, %s22
      %s26 = sphi 0, %s25
      %s42 = sphi 0, %s26
      %s46 = sphi 0, %s46
      %s48 = sphi 0, %s46
      %s49 = sphi 0, %s48
      %s63 = sphi 0, %s49
      %s67 = sphi 0, %s67
      %s69 = sphi 0, %s67
      %s70 = sphi 0, %s69
      %s84 = sphi 0, %s70
      %s90 = sphi 0, %s92
      %s93 = sphi 0, %s90
      %s94 = sphi 0, %s93
      %s110 = sphi 0, %s94
    $region4: #{tpu_custom_call.1} parent=1 // loop_header_branch
      %15 = sbr.rel (%p13) target = $region8
    $region5: #{tpu_custom_call.1} parent=1 // loop_body
      %s17 = ssub.s32 %s12, 1
      %s18 = ssub.s32 %s12, 2
      %s19 = sadd.s32 %s12, 1
      %s20 = ssub.s32 %s12, %s19
      %p21 = scmp.eq.s32.totalorder %s20, 0
      %s23 = sadd.s32 %s22, 1
      %s24 = scalar_select %p21, %s22, %s23
      %p27 = pneg %p21
      %p28 = scmp.eq.s32.totalorder %s12, 1
      %p29 = por %p27, %p28
      %p30 = scmp.ne.s32.totalorder %s22, %s25
      %p31 = scmp.eq.s32.totalorder %s12, 0
      %p32 = por %p30, %p31
      %p33 = scmp.ne.s32.totalorder %s22, %s25
      %p34 = scmp.eq.s32.totalorder %s17, 1
      %p35 = por %p33, %p34
      %p36 = scmp.ne.s32.totalorder %s25, %s26
      %p37 = scmp.eq.s32.totalorder %s17, 0
      %p38 = por %p36, %p37
      %p39 = scmp.ne.s32.totalorder %s25, %s26
      %p40 = scmp.eq.s32.totalorder %s18, 1
      %p41 = por %p39, %p40
      %p43 = scmp.ne.s32.totalorder %s26, %s42
      %p44 = scmp.eq.s32.totalorder %s18, 0
      %p45 = por %p43, %p44
      %s47 = sadd.s32 %s46, 1
      %p50 = scmp.eq.s32.totalorder %s12, 1
      %p51 = scmp.ne.s32.totalorder %s46, %s48
      %p52 = scmp.eq.s32.totalorder %s12, 0
      %p53 = por %p51, %p52
      %p54 = scmp.ne.s32.totalorder %s46, %s48
      %p55 = scmp.eq.s32.totalorder %s17, 1
      %p56 = por %p54, %p55
      %p57 = scmp.ne.s32.totalorder %s48, %s49
      %p58 = scmp.eq.s32.totalorder %s17, 0
      %p59 = por %p57, %p58
      %p60 = scmp.ne.s32.totalorder %s48, %s49
      %p61 = scmp.eq.s32.totalorder %s18, 1
      %p62 = por %p60, %p61
      %p64 = scmp.ne.s32.totalorder %s49, %s63
      %p65 = scmp.eq.s32.totalorder %s18, 0
      %p66 = por %p64, %p65
      %s68 = sadd.s32 %s67, 1
      %p71 = scmp.eq.s32.totalorder %s12, 1
      %p72 = scmp.ne.s32.totalorder %s67, %s69
      %p73 = scmp.eq.s32.totalorder %s12, 0
      %p74 = por %p72, %p73
      %p75 = scmp.ne.s32.totalorder %s67, %s69
      %p76 = scmp.eq.s32.totalorder %s17, 1
      %p77 = por %p75, %p76
      %p78 = scmp.ne.s32.totalorder %s69, %s70
      %p79 = scmp.eq.s32.totalorder %s17, 0
      %p80 = por %p78, %p79
      %p81 = scmp.ne.s32.totalorder %s69, %s70
      %p82 = scmp.eq.s32.totalorder %s18, 1
      %p83 = por %p81, %p82
      %p85 = scmp.ne.s32.totalorder %s70, %s84
      %p86 = scmp.eq.s32.totalorder %s18, 0
      %p87 = por %p85, %p86
      %s88 = ssub.s32 %s12, %s19
      %p89 = scmp.eq.s32.totalorder %s88, 0
      %s91 = sadd.s32 %s90, 1
      %s92 = scalar_select %p89, %s90, %s91
      %p95 = pneg %p89
      %p96 = scmp.eq.s32.totalorder %s12, 1
      %p97 = por %p95, %p96
      %p98 = scmp.ne.s32.totalorder %s90, %s93
      %p99 = scmp.eq.s32.totalorder %s12, 0
      %p100 = por %p98, %p99
      %p101 = scmp.ne.s32.totalorder %s90, %s93
      %p102 = scmp.eq.s32.totalorder %s17, 1
      %p103 = por %p101, %p102
      %p104 = scmp.ne.s32.totalorder %s93, %s94
      %p105 = scmp.eq.s32.totalorder %s17, 0
      %p106 = por %p104, %p105
      %p107 = scmp.ne.s32.totalorder %s93, %s94
      %p108 = scmp.eq.s32.totalorder %s18, 1
      %p109 = por %p107, %p108
      %p111 = scmp.ne.s32.totalorder %s94, %s110
      %p112 = scmp.eq.s32.totalorder %s18, 0
      %p113 = por %p111, %p112
      %p114 = scmp.le.s32.totalorder 1, %s12
      %p115 = scmp.lt.s32.totalorder %s12, 3
      %p116 = pnand %p114, %p115
      %p117 = pneg %p116
      // Predicated region
      $region9: #{tpu_custom_call.1} parent=5 // pred_check
        _
      $region10: #{tpu_custom_call.1} parent=5 // pred_check_branch
        %119 = sbr.rel (%p116) target = $region12
      $region11: #{tpu_custom_call.1} parent=5 // pred_region
        %s120 = ssub.s32 %s12, 1
        // Predicated region
        $region13: #{tpu_custom_call.1} parent=11 // pred_check
          %p121 = pneg %p59
        $region14: #{tpu_custom_call.1} parent=11 // pred_check_branch
          %123 = sbr.rel (%p121) target = $region16
        $region15: #{tpu_custom_call.1} parent=11 // pred_region
          _
        $region16: #{tpu_custom_call.1} parent=11 // pred_fallthru
          _
        // Predicated region
        $region17: #{tpu_custom_call.1} parent=11 // pred_check
          %p124 = pneg %p80
        $region18: #{tpu_custom_call.1} parent=11 // pred_check_branch
          %126 = sbr.rel (%p124) target = $region20
        $region19: #{tpu_custom_call.1} parent=11 // pred_region
          _
        $region20: #{tpu_custom_call.1} parent=11 // pred_fallthru
          _
      $region12: #{tpu_custom_call.1} parent=5 // pred_fallthru
        _
      %p127 = scmp.lt.s32.totalorder %s12, 2
      // Predicated region
      $region21: #{tpu_custom_call.1} parent=5 // pred_check
        %p128 = pneg %p127
      $region22: #{tpu_custom_call.1} parent=5 // pred_check_branch
        %130 = sbr.rel (%p128) target = $region24
      $region23: #{tpu_custom_call.1} parent=5 // pred_region
        // Predicated region
        $region25: #{tpu_custom_call.1} parent=23 // pred_check
          %p131 = pneg %p32
        $region26: #{tpu_custom_call.1} parent=23 // pred_check_branch
          %133 = sbr.rel (%p131) target = $region28
        $region27: #{tpu_custom_call.1} parent=23 // pred_region
          %s134 = smul.u32 16, %s12
          %p135 = scmp.lt.s32.totalorder %s134, 31
          %s136 = scalar_select %p135, %s134, 31
          %s137 = smul.addr %s136, 4
          %s138 = scalar_lea.vmem %s0, %s137
          %s139 = smul.u32 16, %s12
        $region28: #{tpu_custom_call.1} parent=23 // pred_fallthru
          _
      $region24: #{tpu_custom_call.1} parent=5 // pred_fallthru
        _
      %p140 = scmp.le.s32.totalorder 1, %s12
      %p141 = scmp.lt.s32.totalorder %s12, 3
      %p142 = pnand %p140, %p141
      %p143 = pneg %p142
      // Predicated region
      $region29: #{tpu_custom_call.1} parent=5 // pred_check
        _
      $region30: #{tpu_custom_call.1} parent=5 // pred_check_branch
        %145 = sbr.rel (%p142) target = $region32
      $region31: #{tpu_custom_call.1} parent=5 // pred_region
        %s146 = ssub.s32 %s12, 1
        %s147 = smul.u32 16, %s17
        %p148 = scmp.lt.s32.totalorder %s147, 31
        %s149 = scalar_select %p148, %s147, 31
        %s150 = smul.addr %s149, 4
        %s151 = scalar_lea.vmem %s0, %s150
        %p152 = pneg %p38
        %p153 = pneg %p35
        %p154 = pneg %p59
        %p155 = pneg %p56
        %p156 = pneg %p80
        %p157 = pneg %p77
        %p158 = pneg %p106
        %p159 = pneg %p103
        %s160 = sand.u32 %s93, 1
        %s161 = scalar_lea.sflag [#allocation3], %s160
        %s162 = sand.u32 %s93, 1
        %s163 = smul.addr %s162, 64
        %s164 = scalar_lea.vmem [#allocation2], %s163
        %s165 = smul.u32 16, %s17
        %p166 = scmp.lt.s32.totalorder %s165, 31
        %s167 = scalar_select %p166, %s165, 31
        %s168 = smul.addr %s167, 4
        %s169 = scalar_lea.vmem %s0, %s168
        %s170 = smul.u32 16, %s17
        %s171 = smul.u32 16, %s17
        %v173 = vld [vmem:[%s169] sm:$0xf]
        %v174 = vld [vmem:[%s169 + $0x4] sm:$0xf]
        %v175 = vld [vmem:[%s169 + $0x8] sm:$0xf]
        %v176 = vld [vmem:[%s169 + $0xc] sm:$0xf]
        %v177 = vld [vmem:[%s169 + $0x10] sm:$0xf]
        %v178 = vld [vmem:[%s169 + $0x14] sm:$0xf]
        %v179 = vld [vmem:[%s169 + $0x18] sm:$0xf]
        %v180 = vld [vmem:[%s169 + $0x1c] sm:$0xf]
        %v181 = vld [vmem:[%s169 + $0x20] sm:$0xf]
        %v182 = vld [vmem:[%s169 + $0x24] sm:$0xf]
        %v183 = vld [vmem:[%s169 + $0x28] sm:$0xf]
        %v184 = vld [vmem:[%s169 + $0x2c] sm:$0xf]
        %v185 = vld [vmem:[%s169 + $0x30] sm:$0xf]
        %v186 = vld [vmem:[%s169 + $0x34] sm:$0xf]
        %v187 = vld [vmem:[%s169 + $0x38] sm:$0xf]
        %v188 = vld [vmem:[%s169 + $0x3c] sm:$0xf]
        %v189 = vld [vmem:[%s1] sm:$0xf]
        %v190 = vld [vmem:[%s1 + $0x4] sm:$0xf]
        %v191 = vld [vmem:[%s1 + $0x8] sm:$0xf]
        %v192 = vld [vmem:[%s1 + $0xc] sm:$0xf]
        %v193 = vld [vmem:[%s1 + $0x10] sm:$0xf]
        %v194 = vld [vmem:[%s1 + $0x14] sm:$0xf]
        %v195 = vld [vmem:[%s1 + $0x18] sm:$0xf]
        %v196 = vld [vmem:[%s1 + $0x1c] sm:$0xf]
        %v197 = vld [vmem:[%s2] sm:$0x1]
        %v199 = vlaneseq
        %v200 = vshrl.u32 %v199, 7
        %v201 = vsub.s32 0, %v200
        %v202 = vrot.slane %v197, %v201
        %v220 = vunpack.c.l.b16 %v173
        %v221 = vunpack.c.l.b16 %v174
        %v222 = vunpack.c.l.b16 %v175
        %v223 = vunpack.c.l.b16 %v176
        %v224 = vunpack.c.l.b16 %v177
        %v225 = vunpack.c.l.b16 %v178
        %v226 = vunpack.c.l.b16 %v179
        %v227 = vunpack.c.l.b16 %v180
        %v228 = vunpack.c.l.b16 %v181
        %v229 = vunpack.c.l.b16 %v182
        %v230 = vunpack.c.l.b16 %v183
        %v231 = vunpack.c.l.b16 %v184
        %v232 = vunpack.c.l.b16 %v185
        %v233 = vunpack.c.l.b16 %v186
        %v234 = vunpack.c.l.b16 %v187
        %v235 = vunpack.c.l.b16 %v188
        %v236 = vpack.c.b16 %v221, %v220
        %v237 = vpack.c.b16 %v223, %v222
        %v238 = vpack.c.b16 %v225, %v224
        %v239 = vpack.c.b16 %v227, %v226
        %v240 = vpack.c.b16 %v229, %v228
        %v241 = vpack.c.b16 %v231, %v230
        %v242 = vpack.c.b16 %v233, %v232
        %v243 = vpack.c.b16 %v235, %v234
        %v252 = vunpack.c.l.b16 %v189
        %v253 = vunpack.c.l.b16 %v190
        %v254 = vunpack.c.l.b16 %v191
        %v255 = vunpack.c.l.b16 %v192
        %v256 = vunpack.c.l.b16 %v193
        %v257 = vunpack.c.l.b16 %v194
        %v258 = vunpack.c.l.b16 %v195
        %v259 = vunpack.c.l.b16 %v196
        %v260 = vpack.c.b16 %v253, %v252
        %v261 = vpack.c.b16 %v255, %v254
        %v262 = vpack.c.b16 %v257, %v256
        %v263 = vpack.c.b16 %v259, %v258
        %vm268 = vcmask 523264
        %v270 = vsel %vm268, %v236, 0
        %v273 = vsel %vm268, %v237, 0
        %v276 = vsel %vm268, %v238, 0
        %v279 = vsel %vm268, %v239, 0
        %v282 = vsel %vm268, %v240, 0
        %v285 = vsel %vm268, %v241, 0
        %v288 = vsel %vm268, %v242, 0
        %v291 = vsel %vm268, %v243, 0
        %293 = vmatprep.subr.bf16.mxu0 0
        %294 = vmatpush1.bf16.msra.mxu0 0
        %295 = vmatprep.subr.bf16.mxu0 0
        %296 = vmatpush1.bf16.msra.mxu0 0
        %297 = vmatprep.subr.bf16.mxu0 0
        %298 = vmatpush1.bf16.msra.mxu0 0
        %299 = vmatprep.subr.bf16.mxu0 0
        %300 = vmatpush1.bf16.msra.mxu0 0
        %301 = vmatprep.subr.bf16.mxu0 0
        %302 = vmatpush1.bf16.msra.mxu0 %v263
        %303 = vmatprep.subr.bf16.mxu0 0
        %304 = vmatpush1.bf16.msra.mxu0 %v262
        %305 = vmatprep.subr.bf16.mxu0 0
        %306 = vmatpush1.bf16.msra.mxu0 %v261
        %307 = vmatprep.subr.bf16.mxu0 0
        %308 = vmatpush1.bf16.msra.mxu0 %v260
        %309 = vmatprep.subr.bf16.mxu0 0
        %310 = vmatpush2.bf16.msra.mxu0 0
        %311 = vmatprep.subr.bf16.mxu0 0
        %312 = vmatpush2.bf16.msra.mxu0 0
        %313 = vmatprep.subr.bf16.mxu0 0
        %314 = vmatpush2.bf16.msra.mxu0 0
        %315 = vmatprep.subr.bf16.mxu0 0
        %316 = vmatpush2.bf16.msra.mxu0 0
        %317 = vmatprep.subr.bf16.mxu0 0
        %318 = vmatpush2.bf16.msra.mxu0 0
        %319 = vmatprep.subr.bf16.mxu0 0
        %320 = vmatpush2.bf16.msra.mxu0 0
        %321 = vmatprep.subr.bf16.mxu0 0
        %322 = vmatpush2.bf16.msra.mxu0 0
        %323 = vmatprep.subr.bf16.mxu0 0
        %324 = vmatpush2.bf16.msra.mxu0 0
        %325 = vmatprep.mubr.bf16.mxu0 0
        %326 = vmatmul.mubr.bf16.gmra.mxu0 %v270
        %v327 = vpop.f32.mrf.mxu0
        %v328 = vadd.f32 %v202, %v327
        %v329 = vpop.f32.mrf.mxu0
        %v330 = vpop.f32.mrf.mxu0
        %v331 = vadd.f32 %v202, %v330
        %v332 = vpop.f32.mrf.mxu0
        %333 = vmatprep.mubr.bf16.mxu0 0
        %334 = vmatmul.mubr.bf16.gmra.mxu0 %v273
        %v335 = vpop.f32.mrf.mxu0
        %v336 = vadd.f32 %v202, %v335
        %v337 = vpop.f32.mrf.mxu0
        %v338 = vpop.f32.mrf.mxu0
        %v339 = vadd.f32 %v202, %v338
        %v340 = vpop.f32.mrf.mxu0
        %341 = vmatprep.mubr.bf16.mxu0 0
        %342 = vmatmul.mubr.bf16.gmra.mxu0 %v276
        %v343 = vpop.f32.mrf.mxu0
        %v344 = vadd.f32 %v202, %v343
        %v345 = vpop.f32.mrf.mxu0
        %v346 = vpop.f32.mrf.mxu0
        %v347 = vadd.f32 %v202, %v346
        %v348 = vpop.f32.mrf.mxu0
        %349 = vmatprep.mubr.bf16.mxu0 0
        %350 = vmatmul.mubr.bf16.gmra.mxu0 %v279
        %v351 = vpop.f32.mrf.mxu0
        %v352 = vadd.f32 %v202, %v351
        %v353 = vpop.f32.mrf.mxu0
        %v354 = vpop.f32.mrf.mxu0
        %v355 = vadd.f32 %v202, %v354
        %v356 = vpop.f32.mrf.mxu0
        %357 = vmatprep.mubr.bf16.mxu0 0
        %358 = vmatmul.mubr.bf16.gmra.mxu0 %v282
        %v359 = vpop.f32.mrf.mxu0
        %v360 = vadd.f32 %v202, %v359
        %v361 = vpop.f32.mrf.mxu0
        %v362 = vpop.f32.mrf.mxu0
        %v363 = vadd.f32 %v202, %v362
        %v364 = vpop.f32.mrf.mxu0
        %365 = vmatprep.mubr.bf16.mxu0 0
        %366 = vmatmul.mubr.bf16.gmra.mxu0 %v285
        %v367 = vpop.f32.mrf.mxu0
        %v368 = vadd.f32 %v202, %v367
        %v369 = vpop.f32.mrf.mxu0
        %v370 = vpop.f32.mrf.mxu0
        %v371 = vadd.f32 %v202, %v370
        %v372 = vpop.f32.mrf.mxu0
        %373 = vmatprep.mubr.bf16.mxu0 0
        %374 = vmatmul.mubr.bf16.gmra.mxu0 %v288
        %v375 = vpop.f32.mrf.mxu0
        %v376 = vadd.f32 %v202, %v375
        %v377 = vpop.f32.mrf.mxu0
        %v378 = vpop.f32.mrf.mxu0
        %v379 = vadd.f32 %v202, %v378
        %v380 = vpop.f32.mrf.mxu0
        %381 = vmatprep.mubr.bf16.mxu0 0
        %382 = vmatmul.mubr.bf16.gmra.mxu0 %v291
        %v383 = vpop.f32.mrf.mxu0
        %v384 = vadd.f32 %v202, %v383
        %v385 = vpop.f32.mrf.mxu0
        %v386 = vpop.f32.mrf.mxu0
        %v387 = vadd.f32 %v202, %v386
        %v388 = vpop.f32.mrf.mxu0
        %389 = vdwg.mxu0
        %v390 = vtanh.pop %v328
        %v391 = vtanh.pop %v331
        %v392 = vtanh.pop %v336
        %v393 = vtanh.pop %v339
        %v394 = vtanh.pop %v344
        %v395 = vtanh.pop %v347
        %v396 = vtanh.pop %v352
        %v397 = vtanh.pop %v355
        %v398 = vtanh.pop %v360
        %v399 = vtanh.pop %v363
        %v400 = vtanh.pop %v368
        %v401 = vtanh.pop %v371
        %v402 = vtanh.pop %v376
        %v403 = vtanh.pop %v379
        %v404 = vtanh.pop %v384
        %v405 = vtanh.pop %v387
        %v406 = vpack.c.bf16 %v391, %v390
        %v407 = vpack.c.bf16 %v393, %v392
        %v408 = vpack.c.bf16 %v395, %v394
        %v409 = vpack.c.bf16 %v397, %v396
        %v410 = vpack.c.bf16 %v399, %v398
        %v411 = vpack.c.bf16 %v401, %v400
        %v412 = vpack.c.bf16 %v403, %v402
        %v413 = vpack.c.bf16 %v405, %v404
        %v422 = vunpack.c.l.b16 %v406
        %v423 = vunpack.c.h.b16 %v406
        %v424 = vunpack.c.l.b16 %v407
        %v425 = vunpack.c.h.b16 %v407
        %v426 = vunpack.c.l.b16 %v408
        %v427 = vunpack.c.h.b16 %v408
        %v428 = vunpack.c.l.b16 %v409
        %v429 = vunpack.c.h.b16 %v409
        %v430 = vunpack.c.l.b16 %v410
        %v431 = vunpack.c.h.b16 %v410
        %v432 = vunpack.c.l.b16 %v411
        %v433 = vunpack.c.h.b16 %v411
        %v434 = vunpack.c.l.b16 %v412
        %v435 = vunpack.c.h.b16 %v412
        %v436 = vunpack.c.l.b16 %v413
        %v437 = vunpack.c.h.b16 %v413
        %v438 = vpack.c.b16 %v422, %v422
        %v439 = vpack.c.b16 %v423, %v423
        %v440 = vpack.c.b16 %v424, %v424
        %v441 = vpack.c.b16 %v425, %v425
        %v442 = vpack.c.b16 %v426, %v426
        %v443 = vpack.c.b16 %v427, %v427
        %v444 = vpack.c.b16 %v428, %v428
        %v445 = vpack.c.b16 %v429, %v429
        %v446 = vpack.c.b16 %v430, %v430
        %v447 = vpack.c.b16 %v431, %v431
        %v448 = vpack.c.b16 %v432, %v432
        %v449 = vpack.c.b16 %v433, %v433
        %v450 = vpack.c.b16 %v434, %v434
        %v451 = vpack.c.b16 %v435, %v435
        %v452 = vpack.c.b16 %v436, %v436
        %v453 = vpack.c.b16 %v437, %v437
        %470 = vst [vmem:[%s164] sm:$0xf] %v438
        %471 = vst [vmem:[%s164 + $0x4] sm:$0xf] %v439
        %472 = vst [vmem:[%s164 + $0x8] sm:$0xf] %v440
        %473 = vst [vmem:[%s164 + $0xc] sm:$0xf] %v441
        %474 = vst [vmem:[%s164 + $0x10] sm:$0xf] %v442
        %475 = vst [vmem:[%s164 + $0x14] sm:$0xf] %v443
        %476 = vst [vmem:[%s164 + $0x18] sm:$0xf] %v444
        %477 = vst [vmem:[%s164 + $0x1c] sm:$0xf] %v445
        %478 = vst [vmem:[%s164 + $0x20] sm:$0xf] %v446
        %479 = vst [vmem:[%s164 + $0x24] sm:$0xf] %v447
        %480 = vst [vmem:[%s164 + $0x28] sm:$0xf] %v448
        %481 = vst [vmem:[%s164 + $0x2c] sm:$0xf] %v449
        %482 = vst [vmem:[%s164 + $0x30] sm:$0xf] %v450
        %483 = vst [vmem:[%s164 + $0x34] sm:$0xf] %v451
        %484 = vst [vmem:[%s164 + $0x38] sm:$0xf] %v452
        %485 = vst [vmem:[%s164 + $0x3c] sm:$0xf] %v453
        %s486 = sand.u32 %s93, 1
        %s487 = scalar_lea.sflag [#allocation3], %s486
        %s488 = sand.u32 %s93, 1
        %s489 = smul.addr %s488, 64
        %s490 = scalar_lea.vmem [#allocation2], %s489
        // Predicated region
        $region33: #{tpu_custom_call.1} parent=31 // pred_check
          %p491 = pneg %p103
        $region34: #{tpu_custom_call.1} parent=31 // pred_check_branch
          %493 = sbr.rel (%p491) target = $region36
        $region35: #{tpu_custom_call.1} parent=31 // pred_region
          %s494 = smul.u32 16, %s17
          %s496 = ssub.s32 1024, 1024
          %497 = vsyncadd %s487, %s496
          %s498 = smul.addr %s494, 64
          %s499 = scalar_lea.hbm %s3, %s498
          %s500 = sshll.u32 %s490, 4
          %s501 = int_to_ptr.vmem [resolvable:$true] %s500
          %506 = dma.vmem_to_hbm [thread:$0]  %s501, 1024, %s499, %s487, 64, 64, 4
        $region36: #{tpu_custom_call.1} parent=31 // pred_fallthru
          _
      $region32: #{tpu_custom_call.1} parent=5 // pred_fallthru
        _
      %p507 = scmp.le.s32.totalorder 2, %s12
      // Predicated region
      $region37: #{tpu_custom_call.1} parent=5 // pred_check
        %p508 = pneg %p507
      $region38: #{tpu_custom_call.1} parent=5 // pred_check_branch
        %510 = sbr.rel (%p508) target = $region40
      $region39: #{tpu_custom_call.1} parent=5 // pred_region
        %s511 = ssub.s32 %s12, 2
        // Predicated region
        $region41: #{tpu_custom_call.1} parent=39 // pred_check
          %p512 = pneg %p109
        $region42: #{tpu_custom_call.1} parent=39 // pred_check_branch
          %514 = sbr.rel (%p512) target = $region44
        $region43: #{tpu_custom_call.1} parent=39 // pred_region
          %s515 = sand.u32 %s94, 1
          %s516 = scalar_lea.sflag [#allocation3], %s515
          %s517 = sand.u32 %s94, 1
          %s518 = smul.addr %s517, 64
          %s519 = scalar_lea.vmem [#allocation2], %s518
          %520 = dma.done %s516, 1024
        $region44: #{tpu_custom_call.1} parent=39 // pred_fallthru
          _
      $region40: #{tpu_custom_call.1} parent=5 // pred_fallthru
        _
    $region6: #{tpu_custom_call.1} parent=1 // loop_footer
      %s16 = sadd.s32 1, %s12
    $region7: #{tpu_custom_call.1} parent=1 // loop_footer_branch
      %11 = sbr.rel target = $region3
    $region8: #{tpu_custom_call.1} parent=1 // loop_exit
      _
    %521 = vsyncpa [#allocation3], 1
    %s522 = scalar_lea.sflag [#allocation3], 1
    %523 = vsyncpa %s522, 1

</llo_original>
